<compile_context>
chip_gen: v5e
topology: v5e:2x2
jax: 0.10.0
libtpu: 0.0.40
codegen_flags: <defaults>
</compile_context>

<pallas_src>
import numpy as np
import jax
import jax.numpy as jnp
from jax.experimental import pallas as pl
from jax.experimental.pallas import tpu as pltpu


def _cnn_kernel(x_ref, w_ref, mask_ref, fc_ref, out_ref):
    """x_ref: (Bt*S, D) time-major sentence rows; w_ref: (D, 5*G) packed conv
    weights; mask_ref: (Bt*S, G) additive -inf valid-row mask; fc_ref:
    (G+1, OUTP) folded FC weight + bias row; out_ref: (Bt, OUTP) logits."""
    M = x_ref.shape[0]
    G = mask_ref.shape[1]
    Bt = out_ref.shape[0]
    S = M // Bt
    n_rows = w_ref.shape[1] // G          # 5 packed conv kernel rows

    # One MXU matmul covering every kernel row of every conv branch for all
    # Bt sentences of this block.
    y = jnp.dot(x_ref[...], w_ref[...],
                preferred_element_type=jnp.float32)              # (M, 5*G)

    # conv[t, s, c] = sum_i y[(t+i)*Bt + s, i*G + c] -- shifted adds via
    # sublane rolls (XLU).  Column slices are 128-lane aligned by construction.
    acc = y[:, 0:G]
    for i in range(1, n_rows):
        acc = acc + pltpu.roll(y[:, i * G:(i + 1) * G], shift=M - i * Bt, axis=0)

    # Kill rows past each branch's valid range (== the roll wraparound rows)
    # with the precomputed additive mask, then max over time using contiguous
    # aligned (Bt, G) slices.
    acc = acc + mask_ref[...]
    pooled = acc[0:Bt, :]
    for t in range(1, S):
        pooled = jnp.maximum(pooled, acc[t * Bt:(t + 1) * Bt, :])  # (Bt, G)

    # FC epilogue: dropout scale + conv biases already folded into fc_ref.
    fc = fc_ref[...]
    out = jnp.dot(pooled, fc[:G, :], preferred_element_type=jnp.float32) + fc[G:, :]
    out_ref[...] = out.astype(out_ref.dtype)


def pack_params(params, dropout_p, *, lane_group=128, out_pad=128):
    """One-time parameter packing (layout plumbing kept out of the hot path)."""
    K = params["w3"].shape[0]
    D = params["w3"].shape[3]
    F = 3 * K
    G = lane_group
    assert F <= G, "cnn_kernel_num*3 must fit inside one 128-lane group"
    scale = 1.0 - dropout_p          # == self.dropoutRate in the PyTorch module

    # w_all[:, i*G + g*K + k] = w_{3+g}[k, 0, i, :]; zero where i >= h and in
    # the lane padding of each 128-wide kernel-row group.
    blocks = []
    for i in range(5):
        cols = []
        for h, wname in ((3, "w3"), (4, "w4"), (5, "w5")):
            if i < h:
                cols.append(jnp.transpose(params[wname][:, 0, i, :]))  # (D, K)
            else:
                cols.append(jnp.zeros((D, K), jnp.float32))
        cols.append(jnp.zeros((D, G - F), jnp.float32))
        blocks.append(jnp.concatenate(cols, axis=1))                   # (D, G)
    w_all = jnp.concatenate(blocks, axis=1)                            # (D, 5G)

    # Fold conv biases and the eval dropout scale into the FC layer:
    #   out = scale*(maxconv_nb + b_conv) @ Wfc^T + bfc
    #       = maxconv_nb @ (scale*Wfc)^T + (scale * Wfc @ b_conv + bfc)
    # Output dim zero-padded to `out_pad` lanes for a lane-dense store.
    b_conv = jnp.concatenate([params["b3"], params["b4"], params["b5"]])   # (F,)
    wfc, bfc = params["wfc"], params["bfc"]                                # (2,F),(2,)
    wfc_eff = (scale * wfc).T                                              # (F, 2)
    bfc_eff = bfc + scale * (wfc @ b_conv)                                 # (2,)
    fc_aug = jnp.zeros((G + 1, out_pad), jnp.float32)
    fc_aug = fc_aug.at[:F, :2].set(wfc_eff)
    fc_aug = fc_aug.at[G, :2].set(bfc_eff)

    # TODO(synk): optional bf16 repack of w_all / x (native v6e/v7x MXU rate)
    # is omitted to keep exact f32 parity with the PyTorch module.
    return {"w_all": w_all, "fc_aug": fc_aug, "F": F, "G": G, "K": K}


def _build_mask(S, Bt, G, K):
    """Additive -inf mask, time-major rows (r = t*Bt + s): for branch h = g+3,
    rows with t > S - h (out-of-range conv / roll wraparound) are disabled."""
    m = np.zeros((S, G), np.float32)
    for g in range(3):
        h = g + 3
        m[S - h + 1:, g * K:(g + 1) * K] = -np.inf
    return np.repeat(m, Bt, axis=0)          # (S*Bt, G)


def cnn_forward_batched(xb, packed, *, rows_per_block=256):
    """xb: (B, S, D) f32. Returns logits (B, 2).

    rows_per_block: target matmul M rows per grid step (256 fills a v6e/v7x
    MXU pass; use 128 on v5e).  The batch is zero-padded to whole blocks."""
    B, S, D = xb.shape
    if S < 5:
        raise ValueError("sentence length must be >= 5 for the h=5 conv branch")

    w_all, fc_aug = packed["w_all"], packed["fc_aug"]
    G, K = packed["G"], packed["K"]
    OUTP = fc_aug.shape[1]
    n_rows = w_all.shape[1] // G                       # 5

    # Sentences per grid step, rounded up to a multiple of 8 so the output
    # block sublane dim and M = Bt*S stay 8-aligned.
    Bt = ((max(1, rows_per_block // S) + 7) // 8) * 8
    num_blocks = pl.cdiv(B, Bt)
    B_pad = num_blocks * Bt
    M = Bt * S

    # Wrapper-side layout plumbing: pad the batch, then flatten each block of
    # Bt sentences TIME-MAJOR (row r = t*Bt + s).
    xb_pad = jnp.pad(xb.astype(jnp.float32), ((0, B_pad - B), (0, 0), (0, 0)))
    x_flat = (xb_pad.reshape(num_blocks, Bt, S, D)
              .transpose(0, 2, 1, 3)
              .reshape(num_blocks * M, D))

    mask = jnp.asarray(_build_mask(S, Bt, G, K))       # (M, G) constant

    flops = 2 * num_blocks * (M * D * n_rows * G + Bt * G * OUTP)
    bytes_accessed = 4 * (num_blocks * M * D + D * n_rows * G + M * G
                          + (G + 1) * OUTP + B_pad * OUTP)

    out = pl.pallas_call(
        _cnn_kernel,
        out_shape=jax.ShapeDtypeStruct((B_pad, OUTP), jnp.float32),
        grid=(num_blocks,),
        in_specs=[
            pl.BlockSpec((M, D), lambda b: (b, 0)),
            pl.BlockSpec((D, n_rows * G), lambda b: (0, 0)),
            pl.BlockSpec((M, G), lambda b: (0, 0)),
            pl.BlockSpec((G + 1, OUTP), lambda b: (0, 0)),
        ],
        out_specs=pl.BlockSpec((Bt, OUTP), lambda b: (b, 0)),
        compiler_params=pltpu.CompilerParams(
            dimension_semantics=("parallel",)),
        cost_estimate=pl.CostEstimate(
            flops=int(flops), transcendentals=0,
            bytes_accessed=int(bytes_accessed)),
    )(x_flat, w_all, mask, fc_aug)
    return out[:B, :2]


def cnn_forward(x, packed, *, rows_per_block=256):
    """Unbatched module forward: x (S, D) -> logits (2,)."""
    return cnn_forward_batched(x[None], packed, rows_per_block=rows_per_block)[0]


def _reference(x, params, dropout_p):
    """Pure-JAX reference of the eval-path forward (operates on raw params)."""
    pooled = []
    for h, wk, bk in ((3, "w3", "b3"), (4, "w4", "b4"), (5, "w5", "b5")):
        w = params[wk][:, 0]                 # (K, h, D)
        T = x.shape[0] - h + 1
        conv = jnp.stack(
            [jnp.einsum("khd,hd->k", w, x[t:t + h, :]) for t in range(T)], axis=1
        ) + params[bk][:, None]              # (K, T)
        pooled.append(jnp.max(conv, axis=1))
    feat = jnp.concatenate(pooled, axis=0) * (1.0 - dropout_p)   # (3K,)
    return feat @ params["wfc"].T + params["bfc"]                 # (2,)


def _init_params(key, K, D):
    ks = jax.random.split(key, 8)

    def u(k, shape, fan_in):
        bound = 1.0 / jnp.sqrt(fan_in)
        return jax.random.uniform(k, shape, jnp.float32, -bound, bound)

    return {
        "w3": u(ks[0], (K, 1, 3, D), 3 * D),
        "b3": u(ks[1], (K,), 3 * D),
        "w4": u(ks[2], (K, 1, 4, D), 4 * D),
        "b4": u(ks[3], (K,), 4 * D),
        "w5": u(ks[4], (K, 1, 5, D), 5 * D),
        "b5": u(ks[5], (K,), 5 * D),
        "wfc": u(ks[6], (2, 3 * K), 3 * K),
        "bfc": u(ks[7], (2,), 3 * K),
    }


if __name__ == "__main__":
    # args: cnn_kernel_num=8, kdim=32, dropout=0.5; sentence length S=16, batch B=20
    K, D, S, B, DROPOUT = 8, 32, 16, 20, 0.5

    key = jax.random.PRNGKey(0)
    k_params, k_x = jax.random.split(key)
    params = _init_params(k_params, K, D)
    xb = jax.random.normal(k_x, (B, S, D), jnp.float32)

    packed = pack_params(params, DROPOUT)                       # one-time packing

    out_b = jax.block_until_ready(cnn_forward_batched(xb, packed))    # (B, 2)
    out_1 = jax.block_until_ready(cnn_forward(xb[0], packed))         # (2,) module path

    ref_b = jnp.stack([_reference(xb[b], params, DROPOUT) for b in range(B)])
    assert out_b.shape == (B, 2)
    assert out_1.shape == (2,)
    assert jnp.allclose(out_b, ref_b, atol=1e-4, rtol=1e-4), \
        float(jnp.max(jnp.abs(out_b - ref_b)))
    assert jnp.allclose(out_1, ref_b[0], atol=1e-4, rtol=1e-4)

    print("KERNEL_OK")
</pallas_src>

<mosaic_0001>
module attributes {stable_mosaic.version = 11 : i64} {
  func.func @_cnn_kernel(%arg0: i32, %arg1: memref<256x32xf32, #tpu.memory_space<vmem>>, %arg2: memref<32x640xf32, #tpu.memory_space<vmem>>, %arg3: memref<256x128xf32, #tpu.memory_space<vmem>>, %arg4: memref<129x128xf32, #tpu.memory_space<vmem>>, %arg5: memref<16x128xf32, #tpu.memory_space<vmem>>) attributes {dimension_semantics = [#tpu.dimension_semantics<parallel>], iteration_bounds = array<i64: 2>, scalar_prefetch = 0 : i64, scratch_operands = 0 : i64, tpu.core_type = #tpu.core_type<tc>, window_params = [{transform_indices = @transform_0, window_bounds = array<i64: 256, 32>}, {pipeline_mode = #tpu.pipeline_mode<synchronous>, transform_indices = @transform_1, window_bounds = array<i64: 32, 640>}, {pipeline_mode = #tpu.pipeline_mode<synchronous>, transform_indices = @transform_2, window_bounds = array<i64: 256, 128>}, {pipeline_mode = #tpu.pipeline_mode<synchronous>, transform_indices = @transform_3, window_bounds = array<i64: 129, 128>}, {transform_indices = @transform_4, window_bounds = array<i64: 16, 128>}]} {
    %c0 = arith.constant 0 : index
    %c0_0 = arith.constant 0 : index
    %0 = vector.load %arg1[%c0, %c0_0] : memref<256x32xf32, #tpu.memory_space<vmem>>, vector<256x32xf32>
    %c0_1 = arith.constant 0 : index
    %c0_2 = arith.constant 0 : index
    %1 = vector.load %arg2[%c0_1, %c0_2] : memref<32x640xf32, #tpu.memory_space<vmem>>, vector<32x640xf32>
    %cst = arith.constant dense<0.000000e+00> : vector<256x640xf32>
    %2 = tpu.matmul %0, %1, %cst {dimension_numbers = #tpu.dot_dimension_numbers<[1], [0], [0], [1], [0, 0, 1, 1], [], []>} : vector<256x32xf32>, vector<32x640xf32>, vector<256x640xf32> -> vector<256x640xf32>
    %3 = vector.extract_strided_slice %2 {offsets = [0, 0], sizes = [256, 128], strides = [1, 1]} : vector<256x640xf32> to vector<256x128xf32>
    %4 = vector.extract_strided_slice %2 {offsets = [0, 128], sizes = [256, 128], strides = [1, 1]} : vector<256x640xf32> to vector<256x128xf32>
    %c240_i32 = arith.constant 240 : i32
    %5 = tpu.dynamic_rotate %4 by %c240_i32 dim 0 : vector<256x128xf32>, i32 -> vector<256x128xf32>
    %6 = arith.addf %3, %5 : vector<256x128xf32>
    %7 = vector.extract_strided_slice %2 {offsets = [0, 256], sizes = [256, 128], strides = [1, 1]} : vector<256x640xf32> to vector<256x128xf32>
    %c224_i32 = arith.constant 224 : i32
    %8 = tpu.dynamic_rotate %7 by %c224_i32 dim 0 : vector<256x128xf32>, i32 -> vector<256x128xf32>
    %9 = arith.addf %6, %8 : vector<256x128xf32>
    %10 = vector.extract_strided_slice %2 {offsets = [0, 384], sizes = [256, 128], strides = [1, 1]} : vector<256x640xf32> to vector<256x128xf32>
    %c208_i32 = arith.constant 208 : i32
    %11 = tpu.dynamic_rotate %10 by %c208_i32 dim 0 : vector<256x128xf32>, i32 -> vector<256x128xf32>
    %12 = arith.addf %9, %11 : vector<256x128xf32>
    %13 = vector.extract_strided_slice %2 {offsets = [0, 512], sizes = [256, 128], strides = [1, 1]} : vector<256x640xf32> to vector<256x128xf32>
    %c192_i32 = arith.constant 192 : i32
    %14 = tpu.dynamic_rotate %13 by %c192_i32 dim 0 : vector<256x128xf32>, i32 -> vector<256x128xf32>
    %15 = arith.addf %12, %14 : vector<256x128xf32>
    %c0_3 = arith.constant 0 : index
    %c0_4 = arith.constant 0 : index
    %16 = vector.load %arg3[%c0_3, %c0_4] : memref<256x128xf32, #tpu.memory_space<vmem>>, vector<256x128xf32>
    %17 = arith.addf %15, %16 : vector<256x128xf32>
    %18 = vector.extract_strided_slice %17 {offsets = [0, 0], sizes = [16, 128], strides = [1, 1]} : vector<256x128xf32> to vector<16x128xf32>
    %19 = vector.extract_strided_slice %17 {offsets = [16, 0], sizes = [16, 128], strides = [1, 1]} : vector<256x128xf32> to vector<16x128xf32>
    %20 = arith.maximumf %18, %19 : vector<16x128xf32>
    %21 = vector.extract_strided_slice %17 {offsets = [32, 0], sizes = [16, 128], strides = [1, 1]} : vector<256x128xf32> to vector<16x128xf32>
    %22 = arith.maximumf %20, %21 : vector<16x128xf32>
    %23 = vector.extract_strided_slice %17 {offsets = [48, 0], sizes = [16, 128], strides = [1, 1]} : vector<256x128xf32> to vector<16x128xf32>
    %24 = arith.maximumf %22, %23 : vector<16x128xf32>
    %25 = vector.extract_strided_slice %17 {offsets = [64, 0], sizes = [16, 128], strides = [1, 1]} : vector<256x128xf32> to vector<16x128xf32>
    %26 = arith.maximumf %24, %25 : vector<16x128xf32>
    %27 = vector.extract_strided_slice %17 {offsets = [80, 0], sizes = [16, 128], strides = [1, 1]} : vector<256x128xf32> to vector<16x128xf32>
    %28 = arith.maximumf %26, %27 : vector<16x128xf32>
    %29 = vector.extract_strided_slice %17 {offsets = [96, 0], sizes = [16, 128], strides = [1, 1]} : vector<256x128xf32> to vector<16x128xf32>
    %30 = arith.maximumf %28, %29 : vector<16x128xf32>
    %31 = vector.extract_strided_slice %17 {offsets = [112, 0], sizes = [16, 128], strides = [1, 1]} : vector<256x128xf32> to vector<16x128xf32>
    %32 = arith.maximumf %30, %31 : vector<16x128xf32>
    %33 = vector.extract_strided_slice %17 {offsets = [128, 0], sizes = [16, 128], strides = [1, 1]} : vector<256x128xf32> to vector<16x128xf32>
    %34 = arith.maximumf %32, %33 : vector<16x128xf32>
    %35 = vector.extract_strided_slice %17 {offsets = [144, 0], sizes = [16, 128], strides = [1, 1]} : vector<256x128xf32> to vector<16x128xf32>
    %36 = arith.maximumf %34, %35 : vector<16x128xf32>
    %37 = vector.extract_strided_slice %17 {offsets = [160, 0], sizes = [16, 128], strides = [1, 1]} : vector<256x128xf32> to vector<16x128xf32>
    %38 = arith.maximumf %36, %37 : vector<16x128xf32>
    %39 = vector.extract_strided_slice %17 {offsets = [176, 0], sizes = [16, 128], strides = [1, 1]} : vector<256x128xf32> to vector<16x128xf32>
    %40 = arith.maximumf %38, %39 : vector<16x128xf32>
    %41 = vector.extract_strided_slice %17 {offsets = [192, 0], sizes = [16, 128], strides = [1, 1]} : vector<256x128xf32> to vector<16x128xf32>
    %42 = arith.maximumf %40, %41 : vector<16x128xf32>
    %43 = vector.extract_strided_slice %17 {offsets = [208, 0], sizes = [16, 128], strides = [1, 1]} : vector<256x128xf32> to vector<16x128xf32>
    %44 = arith.maximumf %42, %43 : vector<16x128xf32>
    %45 = vector.extract_strided_slice %17 {offsets = [224, 0], sizes = [16, 128], strides = [1, 1]} : vector<256x128xf32> to vector<16x128xf32>
    %46 = arith.maximumf %44, %45 : vector<16x128xf32>
    %47 = vector.extract_strided_slice %17 {offsets = [240, 0], sizes = [16, 128], strides = [1, 1]} : vector<256x128xf32> to vector<16x128xf32>
    %48 = arith.maximumf %46, %47 : vector<16x128xf32>
    %c0_5 = arith.constant 0 : index
    %c0_6 = arith.constant 0 : index
    %49 = vector.load %arg4[%c0_5, %c0_6] : memref<129x128xf32, #tpu.memory_space<vmem>>, vector<129x128xf32>
    %50 = vector.extract_strided_slice %49 {offsets = [0, 0], sizes = [128, 128], strides = [1, 1]} : vector<129x128xf32> to vector<128x128xf32>
    %cst_7 = arith.constant dense<0.000000e+00> : vector<16x128xf32>
    %51 = tpu.matmul %48, %50, %cst_7 {dimension_numbers = #tpu.dot_dimension_numbers<[1], [0], [0], [1], [0, 0, 1, 1], [], []>} : vector<16x128xf32>, vector<128x128xf32>, vector<16x128xf32> -> vector<16x128xf32>
    %52 = vector.extract_strided_slice %49 {offsets = [128, 0], sizes = [1, 128], strides = [1, 1]} : vector<129x128xf32> to vector<1x128xf32>
    %53 = vector.broadcast %52 : vector<1x128xf32> to vector<16x128xf32>
    %54 = arith.addf %51, %53 : vector<16x128xf32>
    %c0_8 = arith.constant 0 : index
    %c0_9 = arith.constant 0 : index
    %55 = vector.load %arg5[%c0_8, %c0_9] : memref<16x128xf32, #tpu.memory_space<vmem>>, vector<16x128xf32>
    tpu.vector_store %arg5[%c0_8, %c0_9], %54 {strides = array<i32>} : memref<16x128xf32, #tpu.memory_space<vmem>>, vector<16x128xf32>,
    return
  }
  func.func @transform_0(%arg0: i32) -> (i32, i32) {
    %c0_i32 = arith.constant 0 : i32
    %c0_i32_0 = arith.constant 0 : i32
    return %arg0, %c0_i32 : i32, i32
  }
  func.func @transform_1(%arg0: i32) -> (i32, i32) {
    %c0_i32 = arith.constant 0 : i32
    %c0_i32_0 = arith.constant 0 : i32
    %c0_i32_1 = arith.constant 0 : i32
    return %c0_i32, %c0_i32_0 : i32, i32
  }
  func.func @transform_2(%arg0: i32) -> (i32, i32) {
    %c0_i32 = arith.constant 0 : i32
    %c0_i32_0 = arith.constant 0 : i32
    %c0_i32_1 = arith.constant 0 : i32
    return %c0_i32, %c0_i32_0 : i32, i32
  }
  func.func @transform_3(%arg0: i32) -> (i32, i32) {
    %c0_i32 = arith.constant 0 : i32
    %c0_i32_0 = arith.constant 0 : i32
    %c0_i32_1 = arith.constant 0 : i32
    return %c0_i32, %c0_i32_0 : i32, i32
  }
  func.func @transform_4(%arg0: i32) -> (i32, i32) {
    %c0_i32 = arith.constant 0 : i32
    %c0_i32_0 = arith.constant 0 : i32
    return %arg0, %c0_i32 : i32, i32
  }
}

</mosaic_0001>

<llo_original>
// kernel: tpu_custom_call.1
$region0: #{tpu_custom_call.1}
  #allocation0 [shape = 'u32[]', space=smem, size = 0x4, offset = 0x4, fixed_abs, tag = 'smem constant byte address 0x4 - core index']
  #allocation1 [shape = 'u32[72,128]{1,0:T(1,128)}', space=vmem, size = 0x9000, scoped, tag = 'internal scratch']
  %s0 = inlined_call_operand.vmem [shape: f32[512,32], index: 0, kind: input, shape index: {}]
  %s1 = inlined_call_operand.vmem [shape: f32[32,640], index: 1, kind: input, shape index: {}]
  %s2 = inlined_call_operand.vmem [shape: f32[256,128], index: 2, kind: input, shape index: {}]
  %s3 = inlined_call_operand.vmem [shape: f32[129,128], index: 3, kind: input, shape index: {}]
  %s4 = inlined_call_operand.hbm [shape: f32[32,128], index: 4, kind: output, shape index: {}]
  %s5 = sld [smem:[#allocation0]]
  $region49: #{tpu_custom_call.1} parent=0
    _
  %s7 = ssub.s32 1, %s5
  %s8 = scalar_select 0, %s7, %s5
  $region1: #{tpu_custom_call.1} parent=0
    #allocation2 [shape = 'u8[16384]{0}', space=vmem, size = 0x4000, scoped, tag = 'output window, operand 0']
    #allocation3 [shape = 's32[2]{0}', space=sflag, size = 0x8, scoped, tag = 'scoped memory for tpu_custom_call.1']
    %9 = vsyncpa [#allocation3], 0
    %s10 = scalar_lea.sflag [#allocation3], 1
    %11 = vsyncpa %s10, 0
    loop: start=0, step=1, limit=4
    $region2: #{tpu_custom_call.1} parent=1 // loop_pre_header
      _
    $region3: #{tpu_custom_call.1} parent=1 // loop_header
      %s13 = sphi 0, %s17
      %p14 = scmp.ge.s32.totalorder %s13, 4
      %s23 = sphi 0, %s25
      %s26 = sphi 0, %s23
      %s27 = sphi 0, %s26
      %s43 = sphi 0, %s27
      %s47 = sphi 0, %s47
      %s49 = sphi 0, %s47
      %s50 = sphi 0, %s49
      %s64 = sphi 0, %s50
      %s68 = sphi 0, %s68
      %s70 = sphi 0, %s68
      %s71 = sphi 0, %s70
      %s85 = sphi 0, %s71
      %s89 = sphi 0, %s89
      %s91 = sphi 0, %s89
      %s92 = sphi 0, %s91
      %s106 = sphi 0, %s92
      %s112 = sphi 0, %s114
      %s115 = sphi 0, %s112
      %s116 = sphi 0, %s115
      %s132 = sphi 0, %s116
    $region4: #{tpu_custom_call.1} parent=1 // loop_header_branch
      %16 = sbr.rel (%p14) target = $region8
    $region5: #{tpu_custom_call.1} parent=1 // loop_body
      %s18 = ssub.s32 %s13, 1
      %s19 = ssub.s32 %s13, 2
      %s20 = sadd.s32 %s13, 1
      %s21 = ssub.s32 %s13, %s20
      %p22 = scmp.eq.s32.totalorder %s21, 0
      %s24 = sadd.s32 %s23, 1
      %s25 = scalar_select %p22, %s23, %s24
      %p28 = pneg %p22
      %p29 = scmp.eq.s32.totalorder %s13, 1
      %p30 = por %p28, %p29
      %p31 = scmp.ne.s32.totalorder %s23, %s26
      %p32 = scmp.eq.s32.totalorder %s13, 0
      %p33 = por %p31, %p32
      %p34 = scmp.ne.s32.totalorder %s23, %s26
      %p35 = scmp.eq.s32.totalorder %s18, 1
      %p36 = por %p34, %p35
      %p37 = scmp.ne.s32.totalorder %s26, %s27
      %p38 = scmp.eq.s32.totalorder %s18, 0
      %p39 = por %p37, %p38
      %p40 = scmp.ne.s32.totalorder %s26, %s27
      %p41 = scmp.eq.s32.totalorder %s19, 1
      %p42 = por %p40, %p41
      %p44 = scmp.ne.s32.totalorder %s27, %s43
      %p45 = scmp.eq.s32.totalorder %s19, 0
      %p46 = por %p44, %p45
      %s48 = sadd.s32 %s47, 1
      %p51 = scmp.eq.s32.totalorder %s13, 1
      %p52 = scmp.ne.s32.totalorder %s47, %s49
      %p53 = scmp.eq.s32.totalorder %s13, 0
      %p54 = por %p52, %p53
      %p55 = scmp.ne.s32.totalorder %s47, %s49
      %p56 = scmp.eq.s32.totalorder %s18, 1
      %p57 = por %p55, %p56
      %p58 = scmp.ne.s32.totalorder %s49, %s50
      %p59 = scmp.eq.s32.totalorder %s18, 0
      %p60 = por %p58, %p59
      %p61 = scmp.ne.s32.totalorder %s49, %s50
      %p62 = scmp.eq.s32.totalorder %s19, 1
      %p63 = por %p61, %p62
      %p65 = scmp.ne.s32.totalorder %s50, %s64
      %p66 = scmp.eq.s32.totalorder %s19, 0
      %p67 = por %p65, %p66
      %s69 = sadd.s32 %s68, 1
      %p72 = scmp.eq.s32.totalorder %s13, 1
      %p73 = scmp.ne.s32.totalorder %s68, %s70
      %p74 = scmp.eq.s32.totalorder %s13, 0
      %p75 = por %p73, %p74
      %p76 = scmp.ne.s32.totalorder %s68, %s70
      %p77 = scmp.eq.s32.totalorder %s18, 1
      %p78 = por %p76, %p77
      %p79 = scmp.ne.s32.totalorder %s70, %s71
      %p80 = scmp.eq.s32.totalorder %s18, 0
      %p81 = por %p79, %p80
      %p82 = scmp.ne.s32.totalorder %s70, %s71
      %p83 = scmp.eq.s32.totalorder %s19, 1
      %p84 = por %p82, %p83
      %p86 = scmp.ne.s32.totalorder %s71, %s85
      %p87 = scmp.eq.s32.totalorder %s19, 0
      %p88 = por %p86, %p87
      %s90 = sadd.s32 %s89, 1
      %p93 = scmp.eq.s32.totalorder %s13, 1
      %p94 = scmp.ne.s32.totalorder %s89, %s91
      %p95 = scmp.eq.s32.totalorder %s13, 0
      %p96 = por %p94, %p95
      %p97 = scmp.ne.s32.totalorder %s89, %s91
      %p98 = scmp.eq.s32.totalorder %s18, 1
      %p99 = por %p97, %p98
      %p100 = scmp.ne.s32.totalorder %s91, %s92
      %p101 = scmp.eq.s32.totalorder %s18, 0
      %p102 = por %p100, %p101
      %p103 = scmp.ne.s32.totalorder %s91, %s92
      %p104 = scmp.eq.s32.totalorder %s19, 1
      %p105 = por %p103, %p104
      %p107 = scmp.ne.s32.totalorder %s92, %s106
      %p108 = scmp.eq.s32.totalorder %s19, 0
      %p109 = por %p107, %p108
      %s110 = ssub.s32 %s13, %s20
      %p111 = scmp.eq.s32.totalorder %s110, 0
      %s113 = sadd.s32 %s112, 1
      %s114 = scalar_select %p111, %s112, %s113
      %p117 = pneg %p111
      %p118 = scmp.eq.s32.totalorder %s13, 1
      %p119 = por %p117, %p118
      %p120 = scmp.ne.s32.totalorder %s112, %s115
      %p121 = scmp.eq.s32.totalorder %s13, 0
      %p122 = por %p120, %p121
      %p123 = scmp.ne.s32.totalorder %s112, %s115
      %p124 = scmp.eq.s32.totalorder %s18, 1
      %p125 = por %p123, %p124
      %p126 = scmp.ne.s32.totalorder %s115, %s116
      %p127 = scmp.eq.s32.totalorder %s18, 0
      %p128 = por %p126, %p127
      %p129 = scmp.ne.s32.totalorder %s115, %s116
      %p130 = scmp.eq.s32.totalorder %s19, 1
      %p131 = por %p129, %p130
      %p133 = scmp.ne.s32.totalorder %s116, %s132
      %p134 = scmp.eq.s32.totalorder %s19, 0
      %p135 = por %p133, %p134
      %p136 = scmp.le.s32.totalorder 1, %s13
      %p137 = scmp.lt.s32.totalorder %s13, 3
      %p138 = pnand %p136, %p137
      %p139 = pneg %p138
      // Predicated region
      $region9: #{tpu_custom_call.1} parent=5 // pred_check
        _
      $region10: #{tpu_custom_call.1} parent=5 // pred_check_branch
        %141 = sbr.rel (%p138) target = $region12
      $region11: #{tpu_custom_call.1} parent=5 // pred_region
        %s142 = ssub.s32 %s13, 1
        // Predicated region
        $region13: #{tpu_custom_call.1} parent=11 // pred_check
          %p143 = pneg %p60
        $region14: #{tpu_custom_call.1} parent=11 // pred_check_branch
          %145 = sbr.rel (%p143) target = $region16
        $region15: #{tpu_custom_call.1} parent=11 // pred_region
          _
        $region16: #{tpu_custom_call.1} parent=11 // pred_fallthru
          _
        // Predicated region
        $region17: #{tpu_custom_call.1} parent=11 // pred_check
          %p146 = pneg %p81
        $region18: #{tpu_custom_call.1} parent=11 // pred_check_branch
          %148 = sbr.rel (%p146) target = $region20
        $region19: #{tpu_custom_call.1} parent=11 // pred_region
          _
        $region20: #{tpu_custom_call.1} parent=11 // pred_fallthru
          _
        // Predicated region
        $region21: #{tpu_custom_call.1} parent=11 // pred_check
          %p149 = pneg %p102
        $region22: #{tpu_custom_call.1} parent=11 // pred_check_branch
          %151 = sbr.rel (%p149) target = $region24
        $region23: #{tpu_custom_call.1} parent=11 // pred_region
          _
        $region24: #{tpu_custom_call.1} parent=11 // pred_fallthru
          _
      $region12: #{tpu_custom_call.1} parent=5 // pred_fallthru
        _
      %p152 = scmp.lt.s32.totalorder %s13, 2
      // Predicated region
      $region25: #{tpu_custom_call.1} parent=5 // pred_check
        %p153 = pneg %p152
      $region26: #{tpu_custom_call.1} parent=5 // pred_check_branch
        %155 = sbr.rel (%p153) target = $region28
      $region27: #{tpu_custom_call.1} parent=5 // pred_region
        // Predicated region
        $region29: #{tpu_custom_call.1} parent=27 // pred_check
          %p156 = pneg %p33
        $region30: #{tpu_custom_call.1} parent=27 // pred_check_branch
          %158 = sbr.rel (%p156) target = $region32
        $region31: #{tpu_custom_call.1} parent=27 // pred_region
          %s159 = smul.u32 32, %s13
          %p160 = scmp.lt.s32.totalorder %s159, 63
          %s161 = scalar_select %p160, %s159, 63
          %s162 = smul.addr %s161, 8
          %s163 = scalar_lea.vmem %s0, %s162
          %s164 = smul.u32 32, %s13
        $region32: #{tpu_custom_call.1} parent=27 // pred_fallthru
          _
      $region28: #{tpu_custom_call.1} parent=5 // pred_fallthru
        _
      %p165 = scmp.le.s32.totalorder 1, %s13
      %p166 = scmp.lt.s32.totalorder %s13, 3
      %p167 = pnand %p165, %p166
      %p168 = pneg %p167
      // Predicated region
      $region33: #{tpu_custom_call.1} parent=5 // pred_check
        _
      $region34: #{tpu_custom_call.1} parent=5 // pred_check_branch
        %170 = sbr.rel (%p167) target = $region36
      $region35: #{tpu_custom_call.1} parent=5 // pred_region
        %s171 = ssub.s32 %s13, 1
        %s172 = smul.u32 32, %s18
        %p173 = scmp.lt.s32.totalorder %s172, 63
        %s174 = scalar_select %p173, %s172, 63
        %s175 = smul.addr %s174, 8
        %s176 = scalar_lea.vmem %s0, %s175
        %p177 = pneg %p39
        %p178 = pneg %p36
        %p179 = pneg %p60
        %p180 = pneg %p57
        %p181 = pneg %p81
        %p182 = pneg %p78
        %p183 = pneg %p102
        %p184 = pneg %p99
        %p185 = pneg %p128
        %p186 = pneg %p125
        %s187 = sand.u32 %s115, 1
        %s188 = scalar_lea.sflag [#allocation3], %s187
        %s189 = sand.u32 %s115, 1
        %s190 = smul.addr %s189, 16
        %s191 = scalar_lea.vmem [#allocation2], %s190
        %s192 = smul.u32 32, %s18
        %p193 = scmp.lt.s32.totalorder %s192, 63
        %s194 = scalar_select %p193, %s192, 63
        %s195 = smul.addr %s194, 8
        %s196 = scalar_lea.vmem %s0, %s195
        %s197 = smul.u32 32, %s18
        %s198 = smul.u32 2, %s18
        %v199 = vld [vmem:[%s196] sm:$0xff]
        %v200 = vld [vmem:[%s196 + $0x8] sm:$0xff]
        %v201 = vld [vmem:[%s196 + $0x10] sm:$0xff]
        %v202 = vld [vmem:[%s196 + $0x18] sm:$0xff]
        %v203 = vld [vmem:[%s196 + $0x20] sm:$0xff]
        %v204 = vld [vmem:[%s196 + $0x28] sm:$0xff]
        %v205 = vld [vmem:[%s196 + $0x30] sm:$0xff]
        %v206 = vld [vmem:[%s196 + $0x38] sm:$0xff]
        %v207 = vld [vmem:[%s196 + $0x40] sm:$0xff]
        %v208 = vld [vmem:[%s196 + $0x48] sm:$0xff]
        %v209 = vld [vmem:[%s196 + $0x50] sm:$0xff]
        %v210 = vld [vmem:[%s196 + $0x58] sm:$0xff]
        %v211 = vld [vmem:[%s196 + $0x60] sm:$0xff]
        %v212 = vld [vmem:[%s196 + $0x68] sm:$0xff]
        %v213 = vld [vmem:[%s196 + $0x70] sm:$0xff]
        %v214 = vld [vmem:[%s196 + $0x78] sm:$0xff]
        %v215 = vld [vmem:[%s196 + $0x80] sm:$0xff]
        %v216 = vld [vmem:[%s196 + $0x88] sm:$0xff]
        %v217 = vld [vmem:[%s196 + $0x90] sm:$0xff]
        %v218 = vld [vmem:[%s196 + $0x98] sm:$0xff]
        %v219 = vld [vmem:[%s196 + $0xa0] sm:$0xff]
        %v220 = vld [vmem:[%s196 + $0xa8] sm:$0xff]
        %v221 = vld [vmem:[%s196 + $0xb0] sm:$0xff]
        %v222 = vld [vmem:[%s196 + $0xb8] sm:$0xff]
        %v223 = vld [vmem:[%s196 + $0xc0] sm:$0xff]
        %v224 = vld [vmem:[%s196 + $0xc8] sm:$0xff]
        %v225 = vld [vmem:[%s196 + $0xd0] sm:$0xff]
        %v226 = vld [vmem:[%s196 + $0xd8] sm:$0xff]
        %v227 = vld [vmem:[%s196 + $0xe0] sm:$0xff]
        %v228 = vld [vmem:[%s196 + $0xe8] sm:$0xff]
        %v229 = vld [vmem:[%s196 + $0xf0] sm:$0xff]
        %v230 = vld [vmem:[%s196 + $0xf8] sm:$0xff]
        %v231 = vld [vmem:[%s1] sm:$0xff]
        %v232 = vld [vmem:[%s1 + $0x8] sm:$0xff]
        %v233 = vld [vmem:[%s1 + $0x10] sm:$0xff]
        %v234 = vld [vmem:[%s1 + $0x18] sm:$0xff]
        %v235 = vld [vmem:[%s1 + $0x20] sm:$0xff]
        %v236 = vld [vmem:[%s1 + $0x28] sm:$0xff]
        %v237 = vld [vmem:[%s1 + $0x30] sm:$0xff]
        %v238 = vld [vmem:[%s1 + $0x38] sm:$0xff]
        %v239 = vld [vmem:[%s1 + $0x40] sm:$0xff]
        %v240 = vld [vmem:[%s1 + $0x48] sm:$0xff]
        %v241 = vld [vmem:[%s1 + $0x50] sm:$0xff]
        %v242 = vld [vmem:[%s1 + $0x58] sm:$0xff]
        %v243 = vld [vmem:[%s1 + $0x60] sm:$0xff]
        %v244 = vld [vmem:[%s1 + $0x68] sm:$0xff]
        %v245 = vld [vmem:[%s1 + $0x70] sm:$0xff]
        %v246 = vld [vmem:[%s1 + $0x78] sm:$0xff]
        %v247 = vld [vmem:[%s1 + $0x80] sm:$0xff]
        %v248 = vld [vmem:[%s1 + $0x88] sm:$0xff]
        %v249 = vld [vmem:[%s1 + $0x90] sm:$0xff]
        %v250 = vld [vmem:[%s1 + $0x98] sm:$0xff]
        %vm251 = vcmask 261120
        %v253 = vsel %vm251, %v199, 0
        %v256 = vsel %vm251, %v200, 0
        %v259 = vsel %vm251, %v201, 0
        %v262 = vsel %vm251, %v202, 0
        %v265 = vsel %vm251, %v203, 0
        %v268 = vsel %vm251, %v204, 0
        %v271 = vsel %vm251, %v205, 0
        %v274 = vsel %vm251, %v206, 0
        %v277 = vsel %vm251, %v207, 0
        %v280 = vsel %vm251, %v208, 0
        %v283 = vsel %vm251, %v209, 0
        %v286 = vsel %vm251, %v210, 0
        %v289 = vsel %vm251, %v211, 0
        %v292 = vsel %vm251, %v212, 0
        %v295 = vsel %vm251, %v213, 0
        %v298 = vsel %vm251, %v214, 0
        %v301 = vsel %vm251, %v215, 0
        %v304 = vsel %vm251, %v216, 0
        %v307 = vsel %vm251, %v217, 0
        %v310 = vsel %vm251, %v218, 0
        %v313 = vsel %vm251, %v219, 0
        %v316 = vsel %vm251, %v220, 0
        %v319 = vsel %vm251, %v221, 0
        %v322 = vsel %vm251, %v222, 0
        %v325 = vsel %vm251, %v223, 0
        %v328 = vsel %vm251, %v224, 0
        %v331 = vsel %vm251, %v225, 0
        %v334 = vsel %vm251, %v226, 0
        %v337 = vsel %vm251, %v227, 0
        %v340 = vsel %vm251, %v228, 0
        %v343 = vsel %vm251, %v229, 0
        %v346 = vsel %vm251, %v230, 0
        %348 = vmatpush.msra.mxu0 0.0
        %349 = vmatpush.msra.mxu0 0.0
        %350 = vmatpush.msra.mxu0 0.0
        %351 = vmatpush.msra.mxu0 0.0
        %352 = vmatpush.msra.mxu0 0.0
        %353 = vmatpush.msra.mxu0 0.0
        %354 = vmatpush.msra.mxu0 0.0
        %355 = vmatpush.msra.mxu0 0.0
        %356 = vmatpush.msra.mxu0 0.0
        %357 = vmatpush.msra.mxu0 0.0
        %358 = vmatpush.msra.mxu0 0.0
        %359 = vmatpush.msra.mxu0 0.0
        %360 = vmatpush.msra.mxu0 %v246
        %361 = vmatpush.msra.mxu0 %v241
        %362 = vmatpush.msra.mxu0 %v236
        %363 = vmatpush.msra.mxu0 %v231
        %364 = vmatmul.f32.gmra.mxu0 %v253
        %v365 = vpop.f32.mrf.mxu0
        %v366 = vadd.f32 0.0, %v365
        %367 = vmatmul.f32.gmra.mxu0 %v256
        %v368 = vpop.f32.mrf.mxu0
        %v369 = vadd.f32 0.0, %v368
        %370 = vmatmul.f32.gmra.mxu0 %v259
        %v371 = vpop.f32.mrf.mxu0
        %v372 = vadd.f32 0.0, %v371
        %373 = vmatmul.f32.gmra.mxu0 %v262
        %v374 = vpop.f32.mrf.mxu0
        %v375 = vadd.f32 0.0, %v374
        %376 = vmatmul.f32.gmra.mxu0 %v265
        %v377 = vpop.f32.mrf.mxu0
        %v378 = vadd.f32 0.0, %v377
        %379 = vmatmul.f32.gmra.mxu0 %v268
        %v380 = vpop.f32.mrf.mxu0
        %v381 = vadd.f32 0.0, %v380
        %382 = vmatmul.f32.gmra.mxu0 %v271
        %v383 = vpop.f32.mrf.mxu0
        %v384 = vadd.f32 0.0, %v383
        %385 = vmatmul.f32.gmra.mxu0 %v274
        %v386 = vpop.f32.mrf.mxu0
        %v387 = vadd.f32 0.0, %v386
        %388 = vmatmul.f32.gmra.mxu0 %v277
        %v389 = vpop.f32.mrf.mxu0
        %v390 = vadd.f32 0.0, %v389
        %391 = vmatmul.f32.gmra.mxu0 %v280
        %v392 = vpop.f32.mrf.mxu0
        %v393 = vadd.f32 0.0, %v392
        %394 = vmatmul.f32.gmra.mxu0 %v283
        %v395 = vpop.f32.mrf.mxu0
        %v396 = vadd.f32 0.0, %v395
        %397 = vmatmul.f32.gmra.mxu0 %v286
        %v398 = vpop.f32.mrf.mxu0
        %v399 = vadd.f32 0.0, %v398
        %400 = vmatmul.f32.gmra.mxu0 %v289
        %v401 = vpop.f32.mrf.mxu0
        %v402 = vadd.f32 0.0, %v401
        %403 = vmatmul.f32.gmra.mxu0 %v292
        %v404 = vpop.f32.mrf.mxu0
        %v405 = vadd.f32 0.0, %v404
        %406 = vmatmul.f32.gmra.mxu0 %v295
        %v407 = vpop.f32.mrf.mxu0
        %v408 = vadd.f32 0.0, %v407
        %409 = vmatmul.f32.gmra.mxu0 %v298
        %v410 = vpop.f32.mrf.mxu0
        %v411 = vadd.f32 0.0, %v410
        %412 = vmatmul.f32.gmra.mxu0 %v301
        %v413 = vpop.f32.mrf.mxu0
        %v414 = vadd.f32 0.0, %v413
        %415 = vmatmul.f32.gmra.mxu0 %v304
        %v416 = vpop.f32.mrf.mxu0
        %v417 = vadd.f32 0.0, %v416
        %418 = vmatmul.f32.gmra.mxu0 %v307
        %v419 = vpop.f32.mrf.mxu0
        %v420 = vadd.f32 0.0, %v419
        %421 = vmatmul.f32.gmra.mxu0 %v310
        %v422 = vpop.f32.mrf.mxu0
        %v423 = vadd.f32 0.0, %v422
        %424 = vmatmul.f32.gmra.mxu0 %v313
        %v425 = vpop.f32.mrf.mxu0
        %v426 = vadd.f32 0.0, %v425
        %427 = vmatmul.f32.gmra.mxu0 %v316
        %v428 = vpop.f32.mrf.mxu0
        %v429 = vadd.f32 0.0, %v428
        %430 = vmatmul.f32.gmra.mxu0 %v319
        %v431 = vpop.f32.mrf.mxu0
        %v432 = vadd.f32 0.0, %v431
        %433 = vmatmul.f32.gmra.mxu0 %v322
        %v434 = vpop.f32.mrf.mxu0
        %v435 = vadd.f32 0.0, %v434
        %436 = vmatmul.f32.gmra.mxu0 %v325
        %v437 = vpop.f32.mrf.mxu0
        %v438 = vadd.f32 0.0, %v437
        %439 = vmatmul.f32.gmra.mxu0 %v328
        %v440 = vpop.f32.mrf.mxu0
        %v441 = vadd.f32 0.0, %v440
        %442 = vmatmul.f32.gmra.mxu0 %v331
        %v443 = vpop.f32.mrf.mxu0
        %v444 = vadd.f32 0.0, %v443
        %445 = vmatmul.f32.gmra.mxu0 %v334
        %v446 = vpop.f32.mrf.mxu0
        %v447 = vadd.f32 0.0, %v446
        %448 = vmatmul.f32.gmra.mxu0 %v337
        %v449 = vpop.f32.mrf.mxu0
        %v450 = vadd.f32 0.0, %v449
        %451 = vmatmul.f32.gmra.mxu0 %v340
        %v452 = vpop.f32.mrf.mxu0
        %v453 = vadd.f32 0.0, %v452
        %454 = vmatmul.f32.gmra.mxu0 %v343
        %v455 = vpop.f32.mrf.mxu0
        %v456 = vadd.f32 0.0, %v455
        %457 = vmatmul.f32.gmra.mxu0 %v346
        %v458 = vpop.f32.mrf.mxu0
        %v459 = vadd.f32 0.0, %v458
        %460 = vdwg.mxu0
        %461 = vmatpush.msra.mxu0 0.0
        %462 = vmatpush.msra.mxu0 0.0
        %463 = vmatpush.msra.mxu0 0.0
        %464 = vmatpush.msra.mxu0 0.0
        %465 = vmatpush.msra.mxu0 0.0
        %466 = vmatpush.msra.mxu0 0.0
        %467 = vmatpush.msra.mxu0 0.0
        %468 = vmatpush.msra.mxu0 0.0
        %469 = vmatpush.msra.mxu0 0.0
        %470 = vmatpush.msra.mxu0 0.0
        %471 = vmatpush.msra.mxu0 0.0
        %472 = vmatpush.msra.mxu0 0.0
        %473 = vmatpush.msra.mxu0 %v247
        %474 = vmatpush.msra.mxu0 %v242
        %475 = vmatpush.msra.mxu0 %v237
        %476 = vmatpush.msra.mxu0 %v232
        %477 = vmatmul.f32.gmra.mxu0 %v253
        %v478 = vpop.f32.mrf.mxu0
        %v479 = vadd.f32 0.0, %v478
        %480 = vmatmul.f32.gmra.mxu0 %v256
        %v481 = vpop.f32.mrf.mxu0
        %v482 = vadd.f32 0.0, %v481
        %483 = vmatmul.f32.gmra.mxu0 %v259
        %v484 = vpop.f32.mrf.mxu0
        %v485 = vadd.f32 0.0, %v484
        %486 = vmatmul.f32.gmra.mxu0 %v262
        %v487 = vpop.f32.mrf.mxu0
        %v488 = vadd.f32 0.0, %v487
        %489 = vmatmul.f32.gmra.mxu0 %v265
        %v490 = vpop.f32.mrf.mxu0
        %v491 = vadd.f32 0.0, %v490
        %492 = vmatmul.f32.gmra.mxu0 %v268
        %v493 = vpop.f32.mrf.mxu0
        %v494 = vadd.f32 0.0, %v493
        %495 = vmatmul.f32.gmra.mxu0 %v271
        %v496 = vpop.f32.mrf.mxu0
        %v497 = vadd.f32 0.0, %v496
        %498 = vmatmul.f32.gmra.mxu0 %v274
        %v499 = vpop.f32.mrf.mxu0
        %v500 = vadd.f32 0.0, %v499
        %501 = vmatmul.f32.gmra.mxu0 %v277
        %v502 = vpop.f32.mrf.mxu0
        %v503 = vadd.f32 0.0, %v502
        %504 = vmatmul.f32.gmra.mxu0 %v280
        %v505 = vpop.f32.mrf.mxu0
        %v506 = vadd.f32 0.0, %v505
        %507 = vmatmul.f32.gmra.mxu0 %v283
        %v508 = vpop.f32.mrf.mxu0
        %v509 = vadd.f32 0.0, %v508
        %510 = vmatmul.f32.gmra.mxu0 %v286
        %v511 = vpop.f32.mrf.mxu0
        %v512 = vadd.f32 0.0, %v511
        %513 = vmatmul.f32.gmra.mxu0 %v289
        %v514 = vpop.f32.mrf.mxu0
        %v515 = vadd.f32 0.0, %v514
        %516 = vmatmul.f32.gmra.mxu0 %v292
        %v517 = vpop.f32.mrf.mxu0
        %v518 = vadd.f32 0.0, %v517
        %519 = vmatmul.f32.gmra.mxu0 %v295
        %v520 = vpop.f32.mrf.mxu0
        %v521 = vadd.f32 0.0, %v520
        %522 = vmatmul.f32.gmra.mxu0 %v298
        %v523 = vpop.f32.mrf.mxu0
        %v524 = vadd.f32 0.0, %v523
        %525 = vmatmul.f32.gmra.mxu0 %v301
        %v526 = vpop.f32.mrf.mxu0
        %v527 = vadd.f32 0.0, %v526
        %528 = vmatmul.f32.gmra.mxu0 %v304
        %v529 = vpop.f32.mrf.mxu0
        %v530 = vadd.f32 0.0, %v529
        %531 = vmatmul.f32.gmra.mxu0 %v307
        %v532 = vpop.f32.mrf.mxu0
        %v533 = vadd.f32 0.0, %v532
        %534 = vmatmul.f32.gmra.mxu0 %v310
        %v535 = vpop.f32.mrf.mxu0
        %v536 = vadd.f32 0.0, %v535
        %537 = vmatmul.f32.gmra.mxu0 %v313
        %v538 = vpop.f32.mrf.mxu0
        %v539 = vadd.f32 0.0, %v538
        %540 = vmatmul.f32.gmra.mxu0 %v316
        %v541 = vpop.f32.mrf.mxu0
        %v542 = vadd.f32 0.0, %v541
        %543 = vmatmul.f32.gmra.mxu0 %v319
        %v544 = vpop.f32.mrf.mxu0
        %v545 = vadd.f32 0.0, %v544
        %546 = vmatmul.f32.gmra.mxu0 %v322
        %v547 = vpop.f32.mrf.mxu0
        %v548 = vadd.f32 0.0, %v547
        %549 = vmatmul.f32.gmra.mxu0 %v325
        %v550 = vpop.f32.mrf.mxu0
        %v551 = vadd.f32 0.0, %v550
        %552 = vmatmul.f32.gmra.mxu0 %v328
        %v553 = vpop.f32.mrf.mxu0
        %v554 = vadd.f32 0.0, %v553
        %555 = vmatmul.f32.gmra.mxu0 %v331
        %v556 = vpop.f32.mrf.mxu0
        %v557 = vadd.f32 0.0, %v556
        %558 = vmatmul.f32.gmra.mxu0 %v334
        %v559 = vpop.f32.mrf.mxu0
        %v560 = vadd.f32 0.0, %v559
        %561 = vmatmul.f32.gmra.mxu0 %v337
        %v562 = vpop.f32.mrf.mxu0
        %v563 = vadd.f32 0.0, %v562
        %564 = vmatmul.f32.gmra.mxu0 %v340
        %v565 = vpop.f32.mrf.mxu0
        %v566 = vadd.f32 0.0, %v565
        %567 = vmatmul.f32.gmra.mxu0 %v343
        %v568 = vpop.f32.mrf.mxu0
        %v569 = vadd.f32 0.0, %v568
        %570 = vmatmul.f32.gmra.mxu0 %v346
        %v571 = vpop.f32.mrf.mxu0
        %v572 = vadd.f32 0.0, %v571
        %573 = vdwg.mxu0
        %574 = vmatpush.msra.mxu0 0.0
        %575 = vmatpush.msra.mxu0 0.0
        %576 = vmatpush.msra.mxu0 0.0
        %577 = vmatpush.msra.mxu0 0.0
        %578 = vmatpush.msra.mxu0 0.0
        %579 = vmatpush.msra.mxu0 0.0
        %580 = vmatpush.msra.mxu0 0.0
        %581 = vmatpush.msra.mxu0 0.0
        %582 = vmatpush.msra.mxu0 0.0
        %583 = vmatpush.msra.mxu0 0.0
        %584 = vmatpush.msra.mxu0 0.0
        %585 = vmatpush.msra.mxu0 0.0
        %586 = vmatpush.msra.mxu0 %v248
        %587 = vmatpush.msra.mxu0 %v243
        %588 = vmatpush.msra.mxu0 %v238
        %589 = vmatpush.msra.mxu0 %v233
        %590 = vmatmul.f32.gmra.mxu0 %v253
        %v591 = vpop.f32.mrf.mxu0
        %v592 = vadd.f32 0.0, %v591
        %593 = vmatmul.f32.gmra.mxu0 %v256
        %v594 = vpop.f32.mrf.mxu0
        %v595 = vadd.f32 0.0, %v594
        %596 = vmatmul.f32.gmra.mxu0 %v259
        %v597 = vpop.f32.mrf.mxu0
        %v598 = vadd.f32 0.0, %v597
        %599 = vmatmul.f32.gmra.mxu0 %v262
        %v600 = vpop.f32.mrf.mxu0
        %v601 = vadd.f32 0.0, %v600
        %602 = vmatmul.f32.gmra.mxu0 %v265
        %v603 = vpop.f32.mrf.mxu0
        %v604 = vadd.f32 0.0, %v603
        %605 = vmatmul.f32.gmra.mxu0 %v268
        %v606 = vpop.f32.mrf.mxu0
        %v607 = vadd.f32 0.0, %v606
        %608 = vmatmul.f32.gmra.mxu0 %v271
        %v609 = vpop.f32.mrf.mxu0
        %v610 = vadd.f32 0.0, %v609
        %611 = vmatmul.f32.gmra.mxu0 %v274
        %v612 = vpop.f32.mrf.mxu0
        %v613 = vadd.f32 0.0, %v612
        %614 = vmatmul.f32.gmra.mxu0 %v277
        %v615 = vpop.f32.mrf.mxu0
        %v616 = vadd.f32 0.0, %v615
        %617 = vmatmul.f32.gmra.mxu0 %v280
        %v618 = vpop.f32.mrf.mxu0
        %v619 = vadd.f32 0.0, %v618
        %620 = vmatmul.f32.gmra.mxu0 %v283
        %v621 = vpop.f32.mrf.mxu0
        %v622 = vadd.f32 0.0, %v621
        %623 = vmatmul.f32.gmra.mxu0 %v286
        %v624 = vpop.f32.mrf.mxu0
        %v625 = vadd.f32 0.0, %v624
        %626 = vmatmul.f32.gmra.mxu0 %v289
        %v627 = vpop.f32.mrf.mxu0
        %v628 = vadd.f32 0.0, %v627
        %629 = vmatmul.f32.gmra.mxu0 %v292
        %v630 = vpop.f32.mrf.mxu0
        %v631 = vadd.f32 0.0, %v630
        %632 = vmatmul.f32.gmra.mxu0 %v295
        %v633 = vpop.f32.mrf.mxu0
        %v634 = vadd.f32 0.0, %v633
        %635 = vmatmul.f32.gmra.mxu0 %v298
        %v636 = vpop.f32.mrf.mxu0
        %v637 = vadd.f32 0.0, %v636
        %638 = vmatmul.f32.gmra.mxu0 %v301
        %v639 = vpop.f32.mrf.mxu0
        %v640 = vadd.f32 0.0, %v639
        %641 = vmatmul.f32.gmra.mxu0 %v304
        %v642 = vpop.f32.mrf.mxu0
        %v643 = vadd.f32 0.0, %v642
        %644 = vmatmul.f32.gmra.mxu0 %v307
        %v645 = vpop.f32.mrf.mxu0
        %v646 = vadd.f32 0.0, %v645
        %647 = vmatmul.f32.gmra.mxu0 %v310
        %v648 = vpop.f32.mrf.mxu0
        %v649 = vadd.f32 0.0, %v648
        %650 = vmatmul.f32.gmra.mxu0 %v313
        %v651 = vpop.f32.mrf.mxu0
        %v652 = vadd.f32 0.0, %v651
        %653 = vmatmul.f32.gmra.mxu0 %v316
        %v654 = vpop.f32.mrf.mxu0
        %v655 = vadd.f32 0.0, %v654
        %656 = vmatmul.f32.gmra.mxu0 %v319
        %v657 = vpop.f32.mrf.mxu0
        %v658 = vadd.f32 0.0, %v657
        %659 = vmatmul.f32.gmra.mxu0 %v322
        %v660 = vpop.f32.mrf.mxu0
        %v661 = vadd.f32 0.0, %v660
        %662 = vmatmul.f32.gmra.mxu0 %v325
        %v663 = vpop.f32.mrf.mxu0
        %v664 = vadd.f32 0.0, %v663
        %665 = vmatmul.f32.gmra.mxu0 %v328
        %v666 = vpop.f32.mrf.mxu0
        %v667 = vadd.f32 0.0, %v666
        %668 = vmatmul.f32.gmra.mxu0 %v331
        %v669 = vpop.f32.mrf.mxu0
        %v670 = vadd.f32 0.0, %v669
        %671 = vmatmul.f32.gmra.mxu0 %v334
        %v672 = vpop.f32.mrf.mxu0
        %v673 = vadd.f32 0.0, %v672
        %674 = vmatmul.f32.gmra.mxu0 %v337
        %v675 = vpop.f32.mrf.mxu0
        %v676 = vadd.f32 0.0, %v675
        %677 = vmatmul.f32.gmra.mxu0 %v340
        %v678 = vpop.f32.mrf.mxu0
        %v679 = vadd.f32 0.0, %v678
        %680 = vmatmul.f32.gmra.mxu0 %v343
        %v681 = vpop.f32.mrf.mxu0
        %v682 = vadd.f32 0.0, %v681
        %683 = vmatmul.f32.gmra.mxu0 %v346
        %v684 = vpop.f32.mrf.mxu0
        %v685 = vadd.f32 0.0, %v684
        %686 = vdwg.mxu0
        %687 = vmatpush.msra.mxu0 0.0
        %688 = vmatpush.msra.mxu0 0.0
        %689 = vmatpush.msra.mxu0 0.0
        %690 = vmatpush.msra.mxu0 0.0
        %691 = vmatpush.msra.mxu0 0.0
        %692 = vmatpush.msra.mxu0 0.0
        %693 = vmatpush.msra.mxu0 0.0
        %694 = vmatpush.msra.mxu0 0.0
        %695 = vmatpush.msra.mxu0 0.0
        %696 = vmatpush.msra.mxu0 0.0
        %697 = vmatpush.msra.mxu0 0.0
        %698 = vmatpush.msra.mxu0 0.0
        %699 = vmatpush.msra.mxu0 %v249
        %700 = vmatpush.msra.mxu0 %v244
        %701 = vmatpush.msra.mxu0 %v239
        %702 = vmatpush.msra.mxu0 %v234
        %703 = vmatmul.f32.gmra.mxu0 %v253
        %v704 = vpop.f32.mrf.mxu0
        %v705 = vadd.f32 0.0, %v704
        %706 = vmatmul.f32.gmra.mxu0 %v256
        %v707 = vpop.f32.mrf.mxu0
        %v708 = vadd.f32 0.0, %v707
        %709 = vmatmul.f32.gmra.mxu0 %v259
        %v710 = vpop.f32.mrf.mxu0
        %v711 = vadd.f32 0.0, %v710
        %712 = vmatmul.f32.gmra.mxu0 %v262
        %v713 = vpop.f32.mrf.mxu0
        %v714 = vadd.f32 0.0, %v713
        %715 = vmatmul.f32.gmra.mxu0 %v265
        %v716 = vpop.f32.mrf.mxu0
        %v717 = vadd.f32 0.0, %v716
        %718 = vmatmul.f32.gmra.mxu0 %v268
        %v719 = vpop.f32.mrf.mxu0
        %v720 = vadd.f32 0.0, %v719
        %721 = vmatmul.f32.gmra.mxu0 %v271
        %v722 = vpop.f32.mrf.mxu0
        %v723 = vadd.f32 0.0, %v722
        %724 = vmatmul.f32.gmra.mxu0 %v274
        %v725 = vpop.f32.mrf.mxu0
        %v726 = vadd.f32 0.0, %v725
        %727 = vmatmul.f32.gmra.mxu0 %v277
        %v728 = vpop.f32.mrf.mxu0
        %v729 = vadd.f32 0.0, %v728
        %730 = vmatmul.f32.gmra.mxu0 %v280
        %v731 = vpop.f32.mrf.mxu0
        %v732 = vadd.f32 0.0, %v731
        %733 = vmatmul.f32.gmra.mxu0 %v283
        %v734 = vpop.f32.mrf.mxu0
        %v735 = vadd.f32 0.0, %v734
        %736 = vmatmul.f32.gmra.mxu0 %v286
        %v737 = vpop.f32.mrf.mxu0
        %v738 = vadd.f32 0.0, %v737
        %739 = vmatmul.f32.gmra.mxu0 %v289
        %v740 = vpop.f32.mrf.mxu0
        %v741 = vadd.f32 0.0, %v740
        %742 = vmatmul.f32.gmra.mxu0 %v292
        %v743 = vpop.f32.mrf.mxu0
        %v744 = vadd.f32 0.0, %v743
        %745 = vmatmul.f32.gmra.mxu0 %v295
        %v746 = vpop.f32.mrf.mxu0
        %v747 = vadd.f32 0.0, %v746
        %748 = vmatmul.f32.gmra.mxu0 %v298
        %v749 = vpop.f32.mrf.mxu0
        %v750 = vadd.f32 0.0, %v749
        %751 = vmatmul.f32.gmra.mxu0 %v301
        %v752 = vpop.f32.mrf.mxu0
        %v753 = vadd.f32 0.0, %v752
        %754 = vmatmul.f32.gmra.mxu0 %v304
        %v755 = vpop.f32.mrf.mxu0
        %v756 = vadd.f32 0.0, %v755
        %757 = vmatmul.f32.gmra.mxu0 %v307
        %v758 = vpop.f32.mrf.mxu0
        %v759 = vadd.f32 0.0, %v758
        %760 = vmatmul.f32.gmra.mxu0 %v310
        %v761 = vpop.f32.mrf.mxu0
        %v762 = vadd.f32 0.0, %v761
        %763 = vmatmul.f32.gmra.mxu0 %v313
        %v764 = vpop.f32.mrf.mxu0
        %v765 = vadd.f32 0.0, %v764
        %766 = vmatmul.f32.gmra.mxu0 %v316
        %v767 = vpop.f32.mrf.mxu0
        %v768 = vadd.f32 0.0, %v767
        %769 = vmatmul.f32.gmra.mxu0 %v319
        %v770 = vpop.f32.mrf.mxu0
        %v771 = vadd.f32 0.0, %v770
        %772 = vmatmul.f32.gmra.mxu0 %v322
        %v773 = vpop.f32.mrf.mxu0
        %v774 = vadd.f32 0.0, %v773
        %775 = vmatmul.f32.gmra.mxu0 %v325
        %v776 = vpop.f32.mrf.mxu0
        %v777 = vadd.f32 0.0, %v776
        %778 = vmatmul.f32.gmra.mxu0 %v328
        %v779 = vpop.f32.mrf.mxu0
        %v780 = vadd.f32 0.0, %v779
        %781 = vmatmul.f32.gmra.mxu0 %v331
        %v782 = vpop.f32.mrf.mxu0
        %v783 = vadd.f32 0.0, %v782
        %784 = vmatmul.f32.gmra.mxu0 %v334
        %v785 = vpop.f32.mrf.mxu0
        %v786 = vadd.f32 0.0, %v785
        %787 = vmatmul.f32.gmra.mxu0 %v337
        %v788 = vpop.f32.mrf.mxu0
        %v789 = vadd.f32 0.0, %v788
        %790 = vmatmul.f32.gmra.mxu0 %v340
        %v791 = vpop.f32.mrf.mxu0
        %v792 = vadd.f32 0.0, %v791
        %793 = vmatmul.f32.gmra.mxu0 %v343
        %v794 = vpop.f32.mrf.mxu0
        %v795 = vadd.f32 0.0, %v794
        %796 = vmatmul.f32.gmra.mxu0 %v346
        %v797 = vpop.f32.mrf.mxu0
        %v798 = vadd.f32 0.0, %v797
        %799 = vdwg.mxu0
        %800 = vmatpush.msra.mxu0 0.0
        %801 = vmatpush.msra.mxu0 0.0
        %802 = vmatpush.msra.mxu0 0.0
        %803 = vmatpush.msra.mxu0 0.0
        %804 = vmatpush.msra.mxu0 0.0
        %805 = vmatpush.msra.mxu0 0.0
        %806 = vmatpush.msra.mxu0 0.0
        %807 = vmatpush.msra.mxu0 0.0
        %808 = vmatpush.msra.mxu0 0.0
        %809 = vmatpush.msra.mxu0 0.0
        %810 = vmatpush.msra.mxu0 0.0
        %811 = vmatpush.msra.mxu0 0.0
        %812 = vmatpush.msra.mxu0 %v250
        %813 = vmatpush.msra.mxu0 %v245
        %814 = vmatpush.msra.mxu0 %v240
        %815 = vmatpush.msra.mxu0 %v235
        %816 = vmatmul.f32.gmra.mxu0 %v253
        %v817 = vpop.f32.mrf.mxu0
        %v818 = vadd.f32 0.0, %v817
        %819 = vmatmul.f32.gmra.mxu0 %v256
        %v820 = vpop.f32.mrf.mxu0
        %v821 = vadd.f32 0.0, %v820
        %822 = vmatmul.f32.gmra.mxu0 %v259
        %v823 = vpop.f32.mrf.mxu0
        %v824 = vadd.f32 0.0, %v823
        %825 = vmatmul.f32.gmra.mxu0 %v262
        %v826 = vpop.f32.mrf.mxu0
        %v827 = vadd.f32 0.0, %v826
        %828 = vmatmul.f32.gmra.mxu0 %v265
        %v829 = vpop.f32.mrf.mxu0
        %v830 = vadd.f32 0.0, %v829
        %831 = vmatmul.f32.gmra.mxu0 %v268
        %v832 = vpop.f32.mrf.mxu0
        %v833 = vadd.f32 0.0, %v832
        %834 = vmatmul.f32.gmra.mxu0 %v271
        %v835 = vpop.f32.mrf.mxu0
        %v836 = vadd.f32 0.0, %v835
        %837 = vmatmul.f32.gmra.mxu0 %v274
        %v838 = vpop.f32.mrf.mxu0
        %v839 = vadd.f32 0.0, %v838
        %840 = vmatmul.f32.gmra.mxu0 %v277
        %v841 = vpop.f32.mrf.mxu0
        %v842 = vadd.f32 0.0, %v841
        %843 = vmatmul.f32.gmra.mxu0 %v280
        %v844 = vpop.f32.mrf.mxu0
        %v845 = vadd.f32 0.0, %v844
        %846 = vmatmul.f32.gmra.mxu0 %v283
        %v847 = vpop.f32.mrf.mxu0
        %v848 = vadd.f32 0.0, %v847
        %849 = vmatmul.f32.gmra.mxu0 %v286
        %v850 = vpop.f32.mrf.mxu0
        %v851 = vadd.f32 0.0, %v850
        %852 = vmatmul.f32.gmra.mxu0 %v289
        %v853 = vpop.f32.mrf.mxu0
        %v854 = vadd.f32 0.0, %v853
        %855 = vmatmul.f32.gmra.mxu0 %v292
        %v856 = vpop.f32.mrf.mxu0
        %v857 = vadd.f32 0.0, %v856
        %858 = vmatmul.f32.gmra.mxu0 %v295
        %v859 = vpop.f32.mrf.mxu0
        %v860 = vadd.f32 0.0, %v859
        %861 = vmatmul.f32.gmra.mxu0 %v298
        %v862 = vpop.f32.mrf.mxu0
        %v863 = vadd.f32 0.0, %v862
        %864 = vmatmul.f32.gmra.mxu0 %v301
        %v865 = vpop.f32.mrf.mxu0
        %v866 = vadd.f32 0.0, %v865
        %867 = vmatmul.f32.gmra.mxu0 %v304
        %v868 = vpop.f32.mrf.mxu0
        %v869 = vadd.f32 0.0, %v868
        %870 = vmatmul.f32.gmra.mxu0 %v307
        %v871 = vpop.f32.mrf.mxu0
        %v872 = vadd.f32 0.0, %v871
        %873 = vmatmul.f32.gmra.mxu0 %v310
        %v874 = vpop.f32.mrf.mxu0
        %v875 = vadd.f32 0.0, %v874
        %876 = vmatmul.f32.gmra.mxu0 %v313
        %v877 = vpop.f32.mrf.mxu0
        %v878 = vadd.f32 0.0, %v877
        %879 = vmatmul.f32.gmra.mxu0 %v316
        %v880 = vpop.f32.mrf.mxu0
        %v881 = vadd.f32 0.0, %v880
        %882 = vmatmul.f32.gmra.mxu0 %v319
        %v883 = vpop.f32.mrf.mxu0
        %v884 = vadd.f32 0.0, %v883
        %885 = vmatmul.f32.gmra.mxu0 %v322
        %v886 = vpop.f32.mrf.mxu0
        %v887 = vadd.f32 0.0, %v886
        %888 = vmatmul.f32.gmra.mxu0 %v325
        %v889 = vpop.f32.mrf.mxu0
        %v890 = vadd.f32 0.0, %v889
        %891 = vmatmul.f32.gmra.mxu0 %v328
        %v892 = vpop.f32.mrf.mxu0
        %v893 = vadd.f32 0.0, %v892
        %894 = vmatmul.f32.gmra.mxu0 %v331
        %v895 = vpop.f32.mrf.mxu0
        %v896 = vadd.f32 0.0, %v895
        %897 = vmatmul.f32.gmra.mxu0 %v334
        %v898 = vpop.f32.mrf.mxu0
        %v899 = vadd.f32 0.0, %v898
        %900 = vmatmul.f32.gmra.mxu0 %v337
        %v901 = vpop.f32.mrf.mxu0
        %v902 = vadd.f32 0.0, %v901
        %903 = vmatmul.f32.gmra.mxu0 %v340
        %v904 = vpop.f32.mrf.mxu0
        %v905 = vadd.f32 0.0, %v904
        %906 = vmatmul.f32.gmra.mxu0 %v343
        %v907 = vpop.f32.mrf.mxu0
        %v908 = vadd.f32 0.0, %v907
        %909 = vmatmul.f32.gmra.mxu0 %v346
        %v910 = vpop.f32.mrf.mxu0
        %v911 = vadd.f32 0.0, %v910
        %912 = vdwg.mxu0
        %v913 = vadd.f32 %v366, %v485
        %v914 = vadd.f32 %v369, %v488
        %v915 = vadd.f32 %v372, %v491
        %v916 = vadd.f32 %v375, %v494
        %v917 = vadd.f32 %v378, %v497
        %v918 = vadd.f32 %v381, %v500
        %v919 = vadd.f32 %v384, %v503
        %v920 = vadd.f32 %v387, %v506
        %v921 = vadd.f32 %v390, %v509
        %v922 = vadd.f32 %v393, %v512
        %v923 = vadd.f32 %v396, %v515
        %v924 = vadd.f32 %v399, %v518
        %v925 = vadd.f32 %v402, %v521
        %v926 = vadd.f32 %v405, %v524
        %v927 = vadd.f32 %v408, %v527
        %v928 = vadd.f32 %v411, %v530
        %v929 = vadd.f32 %v414, %v533
        %v930 = vadd.f32 %v417, %v536
        %v931 = vadd.f32 %v420, %v539
        %v932 = vadd.f32 %v423, %v542
        %v933 = vadd.f32 %v426, %v545
        %v934 = vadd.f32 %v429, %v548
        %v935 = vadd.f32 %v432, %v551
        %v936 = vadd.f32 %v435, %v554
        %v937 = vadd.f32 %v438, %v557
        %v938 = vadd.f32 %v441, %v560
        %v939 = vadd.f32 %v444, %v563
        %v940 = vadd.f32 %v447, %v566
        %v941 = vadd.f32 %v450, %v569
        %v942 = vadd.f32 %v453, %v572
        %v943 = vadd.f32 %v456, %v479
        %v944 = vadd.f32 %v459, %v482
        %v945 = vadd.f32 %v913, %v604
        %v946 = vadd.f32 %v914, %v607
        %v947 = vadd.f32 %v915, %v610
        %v948 = vadd.f32 %v916, %v613
        %v949 = vadd.f32 %v917, %v616
        %v950 = vadd.f32 %v918, %v619
        %v951 = vadd.f32 %v919, %v622
        %v952 = vadd.f32 %v920, %v625
        %v953 = vadd.f32 %v921, %v628
        %v954 = vadd.f32 %v922, %v631
        %v955 = vadd.f32 %v923, %v634
        %v956 = vadd.f32 %v924, %v637
        %v957 = vadd.f32 %v925, %v640
        %v958 = vadd.f32 %v926, %v643
        %v959 = vadd.f32 %v927, %v646
        %v960 = vadd.f32 %v928, %v649
        %v961 = vadd.f32 %v929, %v652
        %v962 = vadd.f32 %v930, %v655
        %v963 = vadd.f32 %v931, %v658
        %v964 = vadd.f32 %v932, %v661
        %v965 = vadd.f32 %v933, %v664
        %v966 = vadd.f32 %v934, %v667
        %v967 = vadd.f32 %v935, %v670
        %v968 = vadd.f32 %v936, %v673
        %v969 = vadd.f32 %v937, %v676
        %v970 = vadd.f32 %v938, %v679
        %v971 = vadd.f32 %v939, %v682
        %v972 = vadd.f32 %v940, %v685
        %v973 = vadd.f32 %v941, %v592
        %v974 = vadd.f32 %v942, %v595
        %v975 = vadd.f32 %v943, %v598
        %v976 = vadd.f32 %v944, %v601
        %v977 = vadd.f32 %v945, %v723
        %v978 = vadd.f32 %v946, %v726
        %v979 = vadd.f32 %v947, %v729
        %v980 = vadd.f32 %v948, %v732
        %v981 = vadd.f32 %v949, %v735
        %v982 = vadd.f32 %v950, %v738
        %v983 = vadd.f32 %v951, %v741
        %v984 = vadd.f32 %v952, %v744
        %v985 = vadd.f32 %v953, %v747
        %v986 = vadd.f32 %v954, %v750
        %v987 = vadd.f32 %v955, %v753
        %v988 = vadd.f32 %v956, %v756
        %v989 = vadd.f32 %v957, %v759
        %v990 = vadd.f32 %v958, %v762
        %v991 = vadd.f32 %v959, %v765
        %v992 = vadd.f32 %v960, %v768
        %v993 = vadd.f32 %v961, %v771
        %v994 = vadd.f32 %v962, %v774
        %v995 = vadd.f32 %v963, %v777
        %v996 = vadd.f32 %v964, %v780
        %v997 = vadd.f32 %v965, %v783
        %v998 = vadd.f32 %v966, %v786
        %v999 = vadd.f32 %v967, %v789
        %v1000 = vadd.f32 %v968, %v792
        %v1001 = vadd.f32 %v969, %v795
        %v1002 = vadd.f32 %v970, %v798
        %v1003 = vadd.f32 %v971, %v705
        %v1004 = vadd.f32 %v972, %v708
        %v1005 = vadd.f32 %v973, %v711
        %v1006 = vadd.f32 %v974, %v714
        %v1007 = vadd.f32 %v975, %v717
        %v1008 = vadd.f32 %v976, %v720
        %v1009 = vadd.f32 %v977, %v842
        %v1010 = vadd.f32 %v978, %v845
        %v1011 = vadd.f32 %v979, %v848
        %v1012 = vadd.f32 %v980, %v851
        %v1013 = vadd.f32 %v981, %v854
        %v1014 = vadd.f32 %v982, %v857
        %v1015 = vadd.f32 %v983, %v860
        %v1016 = vadd.f32 %v984, %v863
        %v1017 = vadd.f32 %v985, %v866
        %v1018 = vadd.f32 %v986, %v869
        %v1019 = vadd.f32 %v987, %v872
        %v1020 = vadd.f32 %v988, %v875
        %v1021 = vadd.f32 %v989, %v878
        %v1022 = vadd.f32 %v990, %v881
        %v1023 = vadd.f32 %v991, %v884
        %v1024 = vadd.f32 %v992, %v887
        %v1025 = vadd.f32 %v993, %v890
        %v1026 = vadd.f32 %v994, %v893
        %v1027 = vadd.f32 %v995, %v896
        %v1028 = vadd.f32 %v996, %v899
        %v1029 = vadd.f32 %v997, %v902
        %v1030 = vadd.f32 %v998, %v905
        %v1031 = vadd.f32 %v999, %v908
        %v1032 = vadd.f32 %v1000, %v911
        %v1033 = vadd.f32 %v1001, %v818
        %v1034 = vadd.f32 %v1002, %v821
        %v1035 = vadd.f32 %v1003, %v824
        %v1036 = vadd.f32 %v1004, %v827
        %v1037 = vadd.f32 %v1005, %v830
        %v1038 = vadd.f32 %v1006, %v833
        %v1039 = vadd.f32 %v1007, %v836
        %v1040 = vadd.f32 %v1008, %v839
        %v1041 = vld [vmem:[%s2] sm:$0xff]
        %v1042 = vld [vmem:[%s2 + $0x8] sm:$0xff]
        %v1043 = vld [vmem:[%s2 + $0x10] sm:$0xff]
        %v1044 = vld [vmem:[%s2 + $0x18] sm:$0xff]
        %v1045 = vld [vmem:[%s2 + $0x20] sm:$0xff]
        %v1046 = vld [vmem:[%s2 + $0x28] sm:$0xff]
        %v1047 = vld [vmem:[%s2 + $0x30] sm:$0xff]
        %v1048 = vld [vmem:[%s2 + $0x38] sm:$0xff]
        %v1049 = vld [vmem:[%s2 + $0x40] sm:$0xff]
        %v1050 = vld [vmem:[%s2 + $0x48] sm:$0xff]
        %v1051 = vld [vmem:[%s2 + $0x50] sm:$0xff]
        %v1052 = vld [vmem:[%s2 + $0x58] sm:$0xff]
        %v1053 = vld [vmem:[%s2 + $0x60] sm:$0xff]
        %v1054 = vld [vmem:[%s2 + $0x68] sm:$0xff]
        %v1055 = vld [vmem:[%s2 + $0x70] sm:$0xff]
        %v1056 = vld [vmem:[%s2 + $0x78] sm:$0xff]
        %v1057 = vld [vmem:[%s2 + $0x80] sm:$0xff]
        %v1058 = vld [vmem:[%s2 + $0x88] sm:$0xff]
        %v1059 = vld [vmem:[%s2 + $0x90] sm:$0xff]
        %v1060 = vld [vmem:[%s2 + $0x98] sm:$0xff]
        %v1061 = vld [vmem:[%s2 + $0xa0] sm:$0xff]
        %v1062 = vld [vmem:[%s2 + $0xa8] sm:$0xff]
        %v1063 = vld [vmem:[%s2 + $0xb0] sm:$0xff]
        %v1064 = vld [vmem:[%s2 + $0xb8] sm:$0xff]
        %v1065 = vld [vmem:[%s2 + $0xc0] sm:$0xff]
        %v1066 = vld [vmem:[%s2 + $0xc8] sm:$0xff]
        %v1067 = vld [vmem:[%s2 + $0xd0] sm:$0xff]
        %v1068 = vld [vmem:[%s2 + $0xd8] sm:$0xff]
        %v1069 = vld [vmem:[%s2 + $0xe0] sm:$0xff]
        %v1070 = vld [vmem:[%s2 + $0xe8] sm:$0xff]
        %v1071 = vld [vmem:[%s2 + $0xf0] sm:$0xff]
        %v1072 = vld [vmem:[%s2 + $0xf8] sm:$0xff]
        %v1073 = vadd.f32 %v1009, %v1041
        %v1074 = vadd.f32 %v1010, %v1042
        %v1075 = vadd.f32 %v1011, %v1043
        %v1076 = vadd.f32 %v1012, %v1044
        %v1077 = vadd.f32 %v1013, %v1045
        %v1078 = vadd.f32 %v1014, %v1046
        %v1079 = vadd.f32 %v1015, %v1047
        %v1080 = vadd.f32 %v1016, %v1048
        %v1081 = vadd.f32 %v1017, %v1049
        %v1082 = vadd.f32 %v1018, %v1050
        %v1083 = vadd.f32 %v1019, %v1051
        %v1084 = vadd.f32 %v1020, %v1052
        %v1085 = vadd.f32 %v1021, %v1053
        %v1086 = vadd.f32 %v1022, %v1054
        %v1087 = vadd.f32 %v1023, %v1055
        %v1088 = vadd.f32 %v1024, %v1056
        %v1089 = vadd.f32 %v1025, %v1057
        %v1090 = vadd.f32 %v1026, %v1058
        %v1091 = vadd.f32 %v1027, %v1059
        %v1092 = vadd.f32 %v1028, %v1060
        %v1093 = vadd.f32 %v1029, %v1061
        %v1094 = vadd.f32 %v1030, %v1062
        %v1095 = vadd.f32 %v1031, %v1063
        %v1096 = vadd.f32 %v1032, %v1064
        %v1097 = vadd.f32 %v1033, %v1065
        %v1098 = vadd.f32 %v1034, %v1066
        %v1099 = vadd.f32 %v1035, %v1067
        %v1100 = vadd.f32 %v1036, %v1068
        %v1101 = vadd.f32 %v1037, %v1069
        %v1102 = vadd.f32 %v1038, %v1070
        %v1103 = vadd.f32 %v1039, %v1071
        %v1104 = vadd.f32 %v1040, %v1072
        %v1105 = vmax.f32 %v1073, %v1075
        %v1106 = vmax.f32 %v1074, %v1076
        %v1107 = vmax.f32 %v1105, %v1077
        %v1108 = vmax.f32 %v1106, %v1078
        %v1109 = vmax.f32 %v1107, %v1079
        %v1110 = vmax.f32 %v1108, %v1080
        %v1111 = vmax.f32 %v1109, %v1081
        %v1112 = vmax.f32 %v1110, %v1082
        %v1113 = vmax.f32 %v1111, %v1083
        %v1114 = vmax.f32 %v1112, %v1084
        %v1115 = vmax.f32 %v1113, %v1085
        %v1116 = vmax.f32 %v1114, %v1086
        %v1117 = vmax.f32 %v1115, %v1087
        %v1118 = vmax.f32 %v1116, %v1088
        %v1119 = vmax.f32 %v1117, %v1089
        %v1120 = vmax.f32 %v1118, %v1090
        %v1121 = vmax.f32 %v1119, %v1091
        %v1122 = vmax.f32 %v1120, %v1092
        %v1123 = vmax.f32 %v1121, %v1093
        %v1124 = vmax.f32 %v1122, %v1094
        %v1125 = vmax.f32 %v1123, %v1095
        %v1126 = vmax.f32 %v1124, %v1096
        %v1127 = vmax.f32 %v1125, %v1097
        %v1128 = vmax.f32 %v1126, %v1098
        %v1129 = vmax.f32 %v1127, %v1099
        %v1130 = vmax.f32 %v1128, %v1100
        %v1131 = vmax.f32 %v1129, %v1101
        %v1132 = vmax.f32 %v1130, %v1102
        %v1133 = vmax.f32 %v1131, %v1103
        %v1134 = vmax.f32 %v1132, %v1104
        %v1135 = vld [vmem:[%s3] sm:$0xff]
        %v1136 = vld [vmem:[%s3 + $0x8] sm:$0xff]
        %v1137 = vld [vmem:[%s3 + $0x10] sm:$0xff]
        %v1138 = vld [vmem:[%s3 + $0x18] sm:$0xff]
        %v1139 = vld [vmem:[%s3 + $0x20] sm:$0xff]
        %v1140 = vld [vmem:[%s3 + $0x28] sm:$0xff]
        %v1141 = vld [vmem:[%s3 + $0x30] sm:$0xff]
        %v1142 = vld [vmem:[%s3 + $0x38] sm:$0xff]
        %v1143 = vld [vmem:[%s3 + $0x40] sm:$0xff]
        %v1144 = vld [vmem:[%s3 + $0x48] sm:$0xff]
        %v1145 = vld [vmem:[%s3 + $0x50] sm:$0xff]
        %v1146 = vld [vmem:[%s3 + $0x58] sm:$0xff]
        %v1147 = vld [vmem:[%s3 + $0x60] sm:$0xff]
        %v1148 = vld [vmem:[%s3 + $0x68] sm:$0xff]
        %v1149 = vld [vmem:[%s3 + $0x70] sm:$0xff]
        %v1150 = vld [vmem:[%s3 + $0x78] sm:$0xff]
        %v1151 = vld [vmem:[%s3 + $0x80] sm:$0x1]
        %v1152 = vperm.slane %v1151, 0
        %1153 = vmatpush.msra.mxu0 %v1150
        %1154 = vmatpush.msra.mxu0 %v1149
        %1155 = vmatpush.msra.mxu0 %v1148
        %1156 = vmatpush.msra.mxu0 %v1147
        %1157 = vmatpush.msra.mxu0 %v1146
        %1158 = vmatpush.msra.mxu0 %v1145
        %1159 = vmatpush.msra.mxu0 %v1144
        %1160 = vmatpush.msra.mxu0 %v1143
        %1161 = vmatpush.msra.mxu0 %v1142
        %1162 = vmatpush.msra.mxu0 %v1141
        %1163 = vmatpush.msra.mxu0 %v1140
        %1164 = vmatpush.msra.mxu0 %v1139
        %1165 = vmatpush.msra.mxu0 %v1138
        %1166 = vmatpush.msra.mxu0 %v1137
        %1167 = vmatpush.msra.mxu0 %v1136
        %1168 = vmatpush.msra.mxu0 %v1135
        %1169 = vmatmul.f32.gmra.mxu0 %v1133
        %v1170 = vpop.f32.mrf.mxu0
        %v1171 = vadd.f32 %v1152, %v1170
        %1172 = vmatmul.f32.gmra.mxu0 %v1134
        %v1173 = vpop.f32.mrf.mxu0
        %v1174 = vadd.f32 %v1152, %v1173
        %1175 = vdwg.mxu0
        %1176 = vst [vmem:[%s191] sm:$0xff] %v1171
        %1177 = vst [vmem:[%s191 + $0x8] sm:$0xff] %v1174
        %s1178 = sand.u32 %s115, 1
        %s1179 = scalar_lea.sflag [#allocation3], %s1178
        %s1180 = sand.u32 %s115, 1
        %s1181 = smul.addr %s1180, 16
        %s1182 = scalar_lea.vmem [#allocation2], %s1181
        // Predicated region
        $region37: #{tpu_custom_call.1} parent=35 // pred_check
          %p1183 = pneg %p125
        $region38: #{tpu_custom_call.1} parent=35 // pred_check_branch
          %1185 = sbr.rel (%p1183) target = $region40
        $region39: #{tpu_custom_call.1} parent=35 // pred_region
          %s1186 = smul.u32 2, %s18
          %1188 = vsyncadd %s1179, 0
          %s1189 = smul.addr %s1186, 8
          %s1190 = scalar_lea.hbm %s4, %s1189
          %s1191 = sshll.u32 %s1182, 4
          %s1192 = int_to_ptr.vmem [resolvable:$true] %s1191
          %s1193 = sshll.u32 %s1190, 4
          %s1194 = int_to_ptr.hbm [resolvable:$true] %s1193
          %1199 = dma.vmem_to_hbm [thread:$0]  %s1192, 256, %s1194, %s1179, 128, 128, 8
        $region40: #{tpu_custom_call.1} parent=35 // pred_fallthru
          _
      $region36: #{tpu_custom_call.1} parent=5 // pred_fallthru
        _
      %p1200 = scmp.le.s32.totalorder 2, %s13
      // Predicated region
      $region41: #{tpu_custom_call.1} parent=5 // pred_check
        %p1201 = pneg %p1200
      $region42: #{tpu_custom_call.1} parent=5 // pred_check_branch
        %1203 = sbr.rel (%p1201) target = $region44
      $region43: #{tpu_custom_call.1} parent=5 // pred_region
        %s1204 = ssub.s32 %s13, 2
        // Predicated region
        $region45: #{tpu_custom_call.1} parent=43 // pred_check
          %p1205 = pneg %p131
        $region46: #{tpu_custom_call.1} parent=43 // pred_check_branch
          %1207 = sbr.rel (%p1205) target = $region48
        $region47: #{tpu_custom_call.1} parent=43 // pred_region
          %s1208 = sand.u32 %s116, 1
          %s1209 = scalar_lea.sflag [#allocation3], %s1208
          %s1210 = sand.u32 %s116, 1
          %s1211 = smul.addr %s1210, 16
          %s1212 = scalar_lea.vmem [#allocation2], %s1211
          %1214 = dma.done %s1209, 256
        $region48: #{tpu_custom_call.1} parent=43 // pred_fallthru
          _
      $region44: #{tpu_custom_call.1} parent=5 // pred_fallthru
        _
    $region6: #{tpu_custom_call.1} parent=1 // loop_footer
      %s17 = sadd.s32 1, %s13
    $region7: #{tpu_custom_call.1} parent=1 // loop_footer_branch
      %12 = sbr.rel target = $region3
    $region8: #{tpu_custom_call.1} parent=1 // loop_exit
      _
    %1215 = vsyncpa [#allocation3], 1
    %s1216 = scalar_lea.sflag [#allocation3], 1
    %1217 = vsyncpa %s1216, 1

</llo_original>
